<compile_context>
chip_gen: v5e
topology: v5e:2x2
jax: 0.10.0
libtpu: 0.0.40
codegen_flags: <defaults>
</compile_context>

<pallas_src>
import functools

import jax
import jax.numpy as jnp
from jax.experimental import pallas as pl
from jax.experimental.pallas import tpu as pltpu


def _rmsnorm_kernel(x_ref, g_ref, o_ref, *, epsilon: float, inv_dim: float):
    # x_ref: (tile_rows, dim) block in VMEM; g_ref: (1, dim) gamma in VMEM.
    # 1) Row-wise mean of squares, accumulated in f32.  Read #1 of x.
    xf = x_ref[...].astype(jnp.float32)
    ms = jnp.sum(xf * xf, axis=-1, keepdims=True) * inv_dim      # (tr, 1)
    # PyTorch adds epsilon AFTER the sqrt -> reproduce exactly.
    inv = pl.reciprocal(jnp.sqrt(ms) + epsilon, approx=False)    # (tr, 1)
    # 2) Scale.  Read #2 of x so the f32 upcast above is not kept live across
    #    the reduction (halves the scratch footprint of the tile).
    g = g_ref[...].astype(jnp.float32)                           # (1, dim)
    o_ref[...] = (x_ref[...].astype(jnp.float32) * inv * g).astype(o_ref.dtype)


def _vmem_capacity_bytes() -> int:
    try:
        cap = int(pltpu.get_tpu_info().vmem_capacity_bytes)
        if cap > 0:
            return cap
    except Exception:
        pass
    return 128 * 1024 * 1024  # conservative default (v5e/v6e); v7x handled by cap below


def _choose_tile_rows(rows: int, dim: int, in_bytes: int) -> int:
    """Row tile (multiple of 8): ~4 MiB input tile, VMEM-safe incl. f32 temps,
    with enough grid steps to feed both v7x TensorCores."""
    vmem_cap = _vmem_capacity_bytes()

    # Target a single input tile of ~4 MiB (HBM-bound kernels are already at
    # ~85% of roofline there; bigger tiles buy <1% and eat v7x headroom).
    target_tile_bytes = min(4 * 1024 * 1024, vmem_cap // 16)
    tr = target_tile_bytes // max(dim * in_bytes, 1)
    tr = max(8, (tr // 8) * 8)

    # Hard cap: double-buffered in + out + ~2 f32 temporaries must stay well
    # below physical VMEM (use <= ~1/2 of capacity as the working-set budget).
    per_row_bytes = 4 * dim * in_bytes + 2 * dim * 4
    max_tr = (vmem_cap // 2) // max(per_row_bytes, 1)
    max_tr = max(8, (max_tr // 8) * 8)
    tr = min(tr, max_tr)

    # Never exceed the (8-aligned) number of rows we actually have.
    rows8 = ((rows + 7) // 8) * 8
    tr = min(tr, rows8)
    tr = max(8, (tr // 8) * 8)

    # Grid-step floor: dimension_semantics=("parallel",) shards this axis over
    # v7x's 2 TensorCores -> make sure there are enough steps to split.
    while tr > 8 and (rows + tr - 1) // tr < 8:
        tr = max(8, ((tr // 2) // 8) * 8)
    return tr


def rmsnorm(x: jax.Array, gamma: jax.Array, epsilon: float,
            *, tile_rows: int | None = None) -> jax.Array:
    orig_shape = x.shape
    dim = orig_shape[-1]
    assert gamma.shape == (dim,)

    rows = 1
    for s in orig_shape[:-1]:
        rows *= s
    x2d = x.reshape(rows, dim)
    g2d = gamma.reshape(1, dim)

    in_bytes = jnp.dtype(x.dtype).itemsize

    if tile_rows is None:
        tr = _choose_tile_rows(rows, dim, in_bytes)
    else:
        tr = max(8, (tile_rows // 8) * 8)

    grid = ((rows + tr - 1) // tr,)  # ragged last block is masked by Pallas

    # Declared VMEM limit reflects real usage: double-buffered in + out tiles,
    # ~2 f32 temporaries of the tile, gamma, plus headroom; clamped below the
    # physical capacity of the current generation.
    vmem_cap = _vmem_capacity_bytes()
    per_step = 4 * tr * dim * in_bytes          # 2x input + 2x output buffers
    temps = 2 * tr * dim * 4                    # f32 upcast + product
    vmem_limit = per_step + temps + dim * 4 + (4 << 20)
    vmem_limit = int(max(16 << 20, min(vmem_limit, vmem_cap - (8 << 20))))

    kernel = functools.partial(_rmsnorm_kernel, epsilon=float(epsilon),
                               inv_dim=1.0 / float(dim))

    out2d = pl.pallas_call(
        kernel,
        out_shape=jax.ShapeDtypeStruct((rows, dim), x.dtype),
        grid_spec=pltpu.PrefetchScalarGridSpec(
            num_scalar_prefetch=0,
            grid=grid,
            in_specs=[
                pl.BlockSpec((tr, dim), lambda i: (i, 0)),
                pl.BlockSpec((1, dim), lambda i: (0, 0)),
            ],
            out_specs=pl.BlockSpec((tr, dim), lambda i: (i, 0)),
        ),
        compiler_params=pltpu.CompilerParams(
            dimension_semantics=("parallel",),
            vmem_limit_bytes=vmem_limit,
        ),
    )(x2d, g2d)

    return out2d.reshape(orig_shape)


def rmsnorm_reference(x: jax.Array, gamma: jax.Array, epsilon: float) -> jax.Array:
    xf = x.astype(jnp.float32)
    rms = jnp.sqrt(jnp.mean(xf * xf, axis=-1, keepdims=True))
    return (gamma.astype(jnp.float32) * xf / (rms + epsilon)).astype(x.dtype)


if __name__ == "__main__":
    batch, seq, hidden = 2, 8, 32
    epsilon = 1e-6

    key = jax.random.PRNGKey(0)
    x = jax.random.normal(key, (batch, seq, hidden), dtype=jnp.float32)
    # Parameter init matches nn.init.ones_(self.gamma)
    gamma = jnp.ones((hidden,), dtype=jnp.float32)

    out = rmsnorm(x, gamma, epsilon)
    out = jax.block_until_ready(out)

    ref = rmsnorm_reference(x, gamma, epsilon)
    assert out.shape == x.shape
    assert jnp.allclose(out, ref, atol=1e-5, rtol=1e-5), "mismatch vs reference"

    print("KERNEL_OK")
</pallas_src>

<mosaic_0001>
module attributes {stable_mosaic.version = 11 : i64} {
  func.func @_rmsnorm_kernel(%arg0: i32, %arg1: memref<8x32xf32, #tpu.memory_space<vmem>>, %arg2: memref<1x32xf32, #tpu.memory_space<vmem>>, %arg3: memref<8x32xf32, #tpu.memory_space<vmem>>) attributes {dimension_semantics = [#tpu.dimension_semantics<parallel>], iteration_bounds = array<i64: 2>, scalar_prefetch = 0 : i64, scratch_operands = 0 : i64, tpu.core_type = #tpu.core_type<tc>, window_params = [{transform_indices = @transform_0, window_bounds = array<i64: 8, 32>}, {pipeline_mode = #tpu.pipeline_mode<synchronous>, transform_indices = @transform_1, window_bounds = array<i64: 1, 32>}, {transform_indices = @transform_2, window_bounds = array<i64: 8, 32>}]} {
    %c0 = arith.constant 0 : index
    %c0_0 = arith.constant 0 : index
    %0 = vector.load %arg1[%c0, %c0_0] : memref<8x32xf32, #tpu.memory_space<vmem>>, vector<8x32xf32>
    %1 = arith.mulf %0, %0 : vector<8x32xf32>
    %cst = arith.constant dense<0.000000e+00> : vector<8xf32>
    %2 = vector.multi_reduction <add>, %1, %cst [1] : vector<8x32xf32> to vector<8xf32>
    %3 = vector.shape_cast %2 : vector<8xf32> to vector<8x1xf32>
    %cst_1 = arith.constant 3.125000e-02 : f32
    %4 = vector.broadcast %cst_1 : f32 to vector<8x1xf32>
    %5 = arith.mulf %3, %4 : vector<8x1xf32>
    %6 = math.sqrt %5 : vector<8x1xf32>
    %cst_2 = arith.constant 9.99999997E-7 : f32
    %7 = vector.broadcast %cst_2 : f32 to vector<8x1xf32>
    %8 = arith.addf %6, %7 : vector<8x1xf32>
    %9 = tpu.reciprocal %8 : vector<8x1xf32> -> vector<8x1xf32>
    %c0_3 = arith.constant 0 : index
    %c0_4 = arith.constant 0 : index
    %10 = vector.load %arg2[%c0_3, %c0_4] : memref<1x32xf32, #tpu.memory_space<vmem>>, vector<1x32xf32>
    %c0_5 = arith.constant 0 : index
    %c0_6 = arith.constant 0 : index
    %11 = vector.load %arg1[%c0_5, %c0_6] : memref<8x32xf32, #tpu.memory_space<vmem>>, vector<8x32xf32>
    %12 = vector.broadcast %9 : vector<8x1xf32> to vector<8x32xf32>
    %13 = arith.mulf %11, %12 : vector<8x32xf32>
    %14 = vector.broadcast %10 : vector<1x32xf32> to vector<8x32xf32>
    %15 = arith.mulf %13, %14 : vector<8x32xf32>
    %c0_7 = arith.constant 0 : index
    %c0_8 = arith.constant 0 : index
    %16 = vector.load %arg3[%c0_7, %c0_8] : memref<8x32xf32, #tpu.memory_space<vmem>>, vector<8x32xf32>
    tpu.vector_store %arg3[%c0_7, %c0_8], %15 {strides = array<i32>} : memref<8x32xf32, #tpu.memory_space<vmem>>, vector<8x32xf32>,
    return
  }
  func.func @transform_0(%arg0: i32) -> (i32, i32) {
    %c0_i32 = arith.constant 0 : i32
    %c0_i32_0 = arith.constant 0 : i32
    return %arg0, %c0_i32 : i32, i32
  }
  func.func @transform_1(%arg0: i32) -> (i32, i32) {
    %c0_i32 = arith.constant 0 : i32
    %c0_i32_0 = arith.constant 0 : i32
    %c0_i32_1 = arith.constant 0 : i32
    return %c0_i32, %c0_i32_0 : i32, i32
  }
  func.func @transform_2(%arg0: i32) -> (i32, i32) {
    %c0_i32 = arith.constant 0 : i32
    %c0_i32_0 = arith.constant 0 : i32
    return %arg0, %c0_i32 : i32, i32
  }
}

</mosaic_0001>

<llo_original>
// kernel: tpu_custom_call.1
$region0: #{tpu_custom_call.1}
  #allocation0 [shape = 'u32[]', space=smem, size = 0x4, offset = 0x4, fixed_abs, tag = 'smem constant byte address 0x4 - core index']
  #allocation1 [shape = 'u32[72,128]{1,0:T(1,128)}', space=vmem, size = 0x9000, scoped, tag = 'internal scratch']
  %s0 = inlined_call_operand.hbm [shape: f32[16,32], index: 0, kind: input, shape index: {}]
  %s1 = inlined_call_operand.hbm [shape: f32[1,32], index: 1, kind: input, shape index: {}]
  %s2 = inlined_call_operand.hbm [shape: f32[16,32], index: 2, kind: output, shape index: {}]
  %s3 = sld [smem:[#allocation0]]
  $region49: #{tpu_custom_call.1} parent=0
    _
  %s5 = ssub.s32 1, %s3
  %s6 = scalar_select 0, %s5, %s3
  $region1: #{tpu_custom_call.1} parent=0
    #allocation2 [shape = 'u8[8192]{0}', space=vmem, size = 0x2000, scoped, tag = 'input window, operand 0']
    #allocation3 [shape = 's32[2]{0}', space=sflag, size = 0x8, scoped, tag = 'scoped memory for tpu_custom_call.1']
    #allocation4 [shape = 's32[2]{0}', space=sflag, size = 0x8, scoped, tag = 'scoped memory for tpu_custom_call.1']
    #allocation5 [shape = 'u8[512]{0}', space=vmem, size = 0x400, scoped, tag = 'input window, operand 1, single buffered']
    #allocation6 [shape = 's32[1]{0}', space=sflag, size = 0x4, scoped, tag = 'scoped memory for tpu_custom_call.1']
    #allocation7 [shape = 'u8[8192]{0}', space=vmem, size = 0x2000, scoped, tag = 'output window, operand 0']
    %7 = vsyncpa [#allocation3], 0
    %s8 = scalar_lea.sflag [#allocation3], 1
    %9 = vsyncpa %s8, 0
    %10 = vsyncpa [#allocation6], 0
    %11 = vsyncpa [#allocation4], 0
    %s12 = scalar_lea.sflag [#allocation4], 1
    %13 = vsyncpa %s12, 0
    loop: start=0, step=1, limit=4
    $region2: #{tpu_custom_call.1} parent=1 // loop_pre_header
      _
    $region3: #{tpu_custom_call.1} parent=1 // loop_header
      %s15 = sphi 0, %s19
      %p16 = scmp.ge.s32.totalorder %s15, 4
      %s25 = sphi 0, %s27
      %s28 = sphi 0, %s25
      %s29 = sphi 0, %s28
      %s45 = sphi 0, %s29
      %s49 = sphi 0, %s49
      %s51 = sphi 0, %s49
      %s52 = sphi 0, %s51
      %s66 = sphi 0, %s52
      %s72 = sphi 0, %s74
      %s75 = sphi 0, %s72
      %s76 = sphi 0, %s75
      %s92 = sphi 0, %s76
    $region4: #{tpu_custom_call.1} parent=1 // loop_header_branch
      %18 = sbr.rel (%p16) target = $region8
    $region5: #{tpu_custom_call.1} parent=1 // loop_body
      %s20 = ssub.s32 %s15, 1
      %s21 = ssub.s32 %s15, 2
      %s22 = sadd.s32 %s15, 1
      %s23 = ssub.s32 %s15, %s22
      %p24 = scmp.eq.s32.totalorder %s23, 0
      %s26 = sadd.s32 %s25, 1
      %s27 = scalar_select %p24, %s25, %s26
      %p30 = pneg %p24
      %p31 = scmp.eq.s32.totalorder %s15, 1
      %p32 = por %p30, %p31
      %p33 = scmp.ne.s32.totalorder %s25, %s28
      %p34 = scmp.eq.s32.totalorder %s15, 0
      %p35 = por %p33, %p34
      %p36 = scmp.ne.s32.totalorder %s25, %s28
      %p37 = scmp.eq.s32.totalorder %s20, 1
      %p38 = por %p36, %p37
      %p39 = scmp.ne.s32.totalorder %s28, %s29
      %p40 = scmp.eq.s32.totalorder %s20, 0
      %p41 = por %p39, %p40
      %p42 = scmp.ne.s32.totalorder %s28, %s29
      %p43 = scmp.eq.s32.totalorder %s21, 1
      %p44 = por %p42, %p43
      %p46 = scmp.ne.s32.totalorder %s29, %s45
      %p47 = scmp.eq.s32.totalorder %s21, 0
      %p48 = por %p46, %p47
      %s50 = sadd.s32 %s49, 1
      %p53 = scmp.eq.s32.totalorder %s15, 1
      %p54 = scmp.ne.s32.totalorder %s49, %s51
      %p55 = scmp.eq.s32.totalorder %s15, 0
      %p56 = por %p54, %p55
      %p57 = scmp.ne.s32.totalorder %s49, %s51
      %p58 = scmp.eq.s32.totalorder %s20, 1
      %p59 = por %p57, %p58
      %p60 = scmp.ne.s32.totalorder %s51, %s52
      %p61 = scmp.eq.s32.totalorder %s20, 0
      %p62 = por %p60, %p61
      %p63 = scmp.ne.s32.totalorder %s51, %s52
      %p64 = scmp.eq.s32.totalorder %s21, 1
      %p65 = por %p63, %p64
      %p67 = scmp.ne.s32.totalorder %s52, %s66
      %p68 = scmp.eq.s32.totalorder %s21, 0
      %p69 = por %p67, %p68
      %s70 = ssub.s32 %s15, %s22
      %p71 = scmp.eq.s32.totalorder %s70, 0
      %s73 = sadd.s32 %s72, 1
      %s74 = scalar_select %p71, %s72, %s73
      %p77 = pneg %p71
      %p78 = scmp.eq.s32.totalorder %s15, 1
      %p79 = por %p77, %p78
      %p80 = scmp.ne.s32.totalorder %s72, %s75
      %p81 = scmp.eq.s32.totalorder %s15, 0
      %p82 = por %p80, %p81
      %p83 = scmp.ne.s32.totalorder %s72, %s75
      %p84 = scmp.eq.s32.totalorder %s20, 1
      %p85 = por %p83, %p84
      %p86 = scmp.ne.s32.totalorder %s75, %s76
      %p87 = scmp.eq.s32.totalorder %s20, 0
      %p88 = por %p86, %p87
      %p89 = scmp.ne.s32.totalorder %s75, %s76
      %p90 = scmp.eq.s32.totalorder %s21, 1
      %p91 = por %p89, %p90
      %p93 = scmp.ne.s32.totalorder %s76, %s92
      %p94 = scmp.eq.s32.totalorder %s21, 0
      %p95 = por %p93, %p94
      %p96 = scmp.le.s32.totalorder 1, %s15
      %p97 = scmp.lt.s32.totalorder %s15, 3
      %p98 = pnand %p96, %p97
      %p99 = pneg %p98
      // Predicated region
      $region9: #{tpu_custom_call.1} parent=5 // pred_check
        _
      $region10: #{tpu_custom_call.1} parent=5 // pred_check_branch
        %101 = sbr.rel (%p98) target = $region12
      $region11: #{tpu_custom_call.1} parent=5 // pred_region
        %s102 = ssub.s32 %s15, 1
        // Predicated region
        $region13: #{tpu_custom_call.1} parent=11 // pred_check
          %p103 = pneg %p62
        $region14: #{tpu_custom_call.1} parent=11 // pred_check_branch
          %105 = sbr.rel (%p103) target = $region16
        $region15: #{tpu_custom_call.1} parent=11 // pred_region
          %107 = vsyncadd [#allocation6], 0
          %s109 = sshll.u32 %s1, 4
          %s110 = int_to_ptr.hbm [resolvable:$true] %s109
          %s111 = sshll.u32 [#allocation5], 4
          %s112 = int_to_ptr.vmem [resolvable:$true] %s111
          %114 = dma.hbm_to_vmem [thread:$0]  %s110, 16, %s112, [#allocation6]
        $region16: #{tpu_custom_call.1} parent=11 // pred_fallthru
          _
      $region12: #{tpu_custom_call.1} parent=5 // pred_fallthru
        _
      %p115 = scmp.lt.s32.totalorder %s15, 2
      // Predicated region
      $region17: #{tpu_custom_call.1} parent=5 // pred_check
        %p116 = pneg %p115
      $region18: #{tpu_custom_call.1} parent=5 // pred_check_branch
        %118 = sbr.rel (%p116) target = $region20
      $region19: #{tpu_custom_call.1} parent=5 // pred_region
        // Predicated region
        $region21: #{tpu_custom_call.1} parent=19 // pred_check
          %p119 = pneg %p35
        $region22: #{tpu_custom_call.1} parent=19 // pred_check_branch
          %121 = sbr.rel (%p119) target = $region24
        $region23: #{tpu_custom_call.1} parent=19 // pred_region
          %s122 = sand.u32 %s25, 1
          %s123 = scalar_lea.sflag [#allocation3], %s122
          %s124 = sand.u32 %s25, 1
          %s125 = smul.addr %s124, 8
          %s126 = scalar_lea.vmem [#allocation2], %s125
          %128 = vsyncadd %s123, 0
          %s129 = smul.addr %s15, 8
          %s130 = scalar_lea.hbm %s0, %s129
          %s132 = sshll.u32 %s130, 4
          %s133 = int_to_ptr.hbm [resolvable:$true] %s132
          %s134 = sshll.u32 %s126, 4
          %s135 = int_to_ptr.vmem [resolvable:$true] %s134
          %137 = dma.hbm_to_vmem [thread:$0]  %s133, 128, %s135, %s123
        $region24: #{tpu_custom_call.1} parent=19 // pred_fallthru
          _
      $region20: #{tpu_custom_call.1} parent=5 // pred_fallthru
        _
      %p138 = scmp.le.s32.totalorder 1, %s15
      %p139 = scmp.lt.s32.totalorder %s15, 3
      %p140 = pnand %p138, %p139
      %p141 = pneg %p140
      // Predicated region
      $region25: #{tpu_custom_call.1} parent=5 // pred_check
        _
      $region26: #{tpu_custom_call.1} parent=5 // pred_check_branch
        %143 = sbr.rel (%p140) target = $region28
      $region27: #{tpu_custom_call.1} parent=5 // pred_region
        %s144 = ssub.s32 %s15, 1
        %s145 = sand.u32 %s28, 1
        %s146 = scalar_lea.sflag [#allocation3], %s145
        %s147 = sand.u32 %s28, 1
        %s148 = smul.addr %s147, 8
        %s149 = scalar_lea.vmem [#allocation2], %s148
        // Predicated region
        $region29: #{tpu_custom_call.1} parent=27 // pred_check
          %p150 = pneg %p41
        $region30: #{tpu_custom_call.1} parent=27 // pred_check_branch
          %152 = sbr.rel (%p150) target = $region32
        $region31: #{tpu_custom_call.1} parent=27 // pred_region
          %154 = dma.done %s146, 128
        $region32: #{tpu_custom_call.1} parent=27 // pred_fallthru
          _
        // Predicated region
        $region33: #{tpu_custom_call.1} parent=27 // pred_check
          %p155 = pneg %p62
        $region34: #{tpu_custom_call.1} parent=27 // pred_check_branch
          %157 = sbr.rel (%p155) target = $region36
        $region35: #{tpu_custom_call.1} parent=27 // pred_region
          %159 = dma.done [#allocation6], 16
        $region36: #{tpu_custom_call.1} parent=27 // pred_fallthru
          _
        %s160 = sand.u32 %s28, 1
        %s161 = scalar_lea.sflag [#allocation3], %s160
        %s162 = sand.u32 %s28, 1
        %s163 = smul.addr %s162, 8
        %s164 = scalar_lea.vmem [#allocation2], %s163
        %p165 = pneg %p41
        %p166 = pneg %p38
        %p167 = pneg %p62
        %p168 = pneg %p59
        %p169 = pneg %p88
        %p170 = pneg %p85
        %s171 = sand.u32 %s75, 1
        %s172 = scalar_lea.sflag [#allocation4], %s171
        %s173 = sand.u32 %s75, 1
        %s174 = smul.addr %s173, 8
        %s175 = scalar_lea.vmem [#allocation7], %s174
        %v176 = vld [vmem:[%s149] sm:$0xff]
        %v177 = vmul.f32 %v176, %v176
        %vm178 = vcmask 261120
        %v179 = vsel %vm178, %v177, 0.0
        %180 = vadd.xlane.f32.xlu0 %v179
        %v181 = vpop.xlane.xlu0 %180
        %v182 = vmul.f32 %v181, 0.03125
        %v183 = vrsqrt.pop %v182
        %v184 = vmul.f32 %v183, %v182
        %v185 = vmul.f32 %v184, %v183
        %v186 = vmul.f32 0.5, %v185
        %v187 = vsub.f32 1.5, %v186
        %v188 = vmul.f32 %v183, %v187
        %v189 = vmul.f32 %v182, %v188
        %vm190 = vcmp.eq.f32.partialorder %v182, inf
        %v191 = vsel %vm190, %v182, %v189
        %vm192 = vcmp.eq.f32.partialorder %v182, 0.0
        %v193 = vand.u32 %v182, 2147483648
        %v194 = vsel %vm192, %v193, %v191
        %v195 = vadd.f32 %v194, 1e-06
        %v196 = vrcp.pop %v195
        %v197 = vmul.f32 %v195, %v196
        %v198 = vsub.f32 1.0, %v197
        %v199 = vmul.f32 %v196, %v198
        %v200 = vadd.f32 %v196, %v199
        %vm201 = vweird.f32 %v195
        %vm202 = vweird.f32 %v196
        %vm203 = vmor %vm201, %vm202
        %v204 = vsel %vm203, %v196, %v200
        %v205 = vand.u32 2147483647, %v195
        %vm206 = vcmp.eq.f32.partialorder %v205, 8.507059e+37
        %v207 = vand.u32 %v195, 2147483648
        %v208 = vor.u32 1.1754944e-38, %v207
        %v209 = vsel %vm206, %v208, %v204
        %v210 = vld [vmem:[#allocation5] sm:$0x1]
        %v211 = vmul.f32 %v176, %v209
        %v213 = vperm.slane %v210, 0
        %v215 = vmul.f32 %v211, %v213
        %216 = vst.msk [vmem:[%s175] sm:$0xff] %vm178, %v215
        %s217 = sand.u32 %s75, 1
        %s218 = scalar_lea.sflag [#allocation4], %s217
        %s219 = sand.u32 %s75, 1
        %s220 = smul.addr %s219, 8
        %s221 = scalar_lea.vmem [#allocation7], %s220
        // Predicated region
        $region37: #{tpu_custom_call.1} parent=27 // pred_check
          %p222 = pneg %p85
        $region38: #{tpu_custom_call.1} parent=27 // pred_check_branch
          %224 = sbr.rel (%p222) target = $region40
        $region39: #{tpu_custom_call.1} parent=27 // pred_region
          %226 = vsyncadd %s218, 0
          %s227 = smul.addr %s20, 8
          %s228 = scalar_lea.hbm %s2, %s227
          %s230 = sshll.u32 %s221, 4
          %s231 = int_to_ptr.vmem [resolvable:$true] %s230
          %s232 = sshll.u32 %s228, 4
          %s233 = int_to_ptr.hbm [resolvable:$true] %s232
          %235 = dma.vmem_to_hbm [thread:$0]  %s231, 128, %s233, %s218
        $region40: #{tpu_custom_call.1} parent=27 // pred_fallthru
          _
      $region28: #{tpu_custom_call.1} parent=5 // pred_fallthru
        _
      %p236 = scmp.le.s32.totalorder 2, %s15
      // Predicated region
      $region41: #{tpu_custom_call.1} parent=5 // pred_check
        %p237 = pneg %p236
      $region42: #{tpu_custom_call.1} parent=5 // pred_check_branch
        %239 = sbr.rel (%p237) target = $region44
      $region43: #{tpu_custom_call.1} parent=5 // pred_region
        %s240 = ssub.s32 %s15, 2
        // Predicated region
        $region45: #{tpu_custom_call.1} parent=43 // pred_check
          %p241 = pneg %p91
        $region46: #{tpu_custom_call.1} parent=43 // pred_check_branch
          %243 = sbr.rel (%p241) target = $region48
        $region47: #{tpu_custom_call.1} parent=43 // pred_region
          %s244 = sand.u32 %s76, 1
          %s245 = scalar_lea.sflag [#allocation4], %s244
          %s246 = sand.u32 %s76, 1
          %s247 = smul.addr %s246, 8
          %s248 = scalar_lea.vmem [#allocation7], %s247
          %250 = dma.done %s245, 128
        $region48: #{tpu_custom_call.1} parent=43 // pred_fallthru
          _
      $region44: #{tpu_custom_call.1} parent=5 // pred_fallthru
        _
    $region6: #{tpu_custom_call.1} parent=1 // loop_footer
      %s19 = sadd.s32 1, %s15
    $region7: #{tpu_custom_call.1} parent=1 // loop_footer_branch
      %14 = sbr.rel target = $region3
    $region8: #{tpu_custom_call.1} parent=1 // loop_exit
      _
    %251 = vsyncpa [#allocation3], 1
    %s252 = scalar_lea.sflag [#allocation3], 1
    %253 = vsyncpa %s252, 1
    %254 = vsyncpa [#allocation6], 1
    %255 = vsyncpa [#allocation4], 1
    %s256 = scalar_lea.sflag [#allocation4], 1
    %257 = vsyncpa %s256, 1

</llo_original>
